<compile_context>
chip_gen: v7x
topology: tpu7x:2x2x1
jax: 0.10.0
libtpu: 0.0.40
codegen_flags: <defaults>
</compile_context>

<pallas_src>
import functools

import jax
import jax.numpy as jnp
from jax import lax
from jax.experimental import pallas as pl
from jax.experimental.pallas import tpu as pltpu


def _round_up(x, m):
    return ((x + m - 1) // m) * m


def _softmax_loss_rscore_kernel(anchor_ref, positive_ref, negative_ref,
                                rscore_ref, loss_ref, m_sc, l_sc,
                                *, alpha, m_valid, mask_cols):
    j = pl.program_id(1)
    nj = pl.num_programs(1)

    # Init running-logsumexp state on the first M step of each N tile.
    @pl.when(j == 0)
    def _():
        m_sc[...] = jnp.full_like(m_sc, -jnp.inf)
        l_sc[...] = jnp.zeros_like(l_sc)

    a = anchor_ref[...]        # (TN, D) native dtype -> MXU
    neg = negative_ref[...]    # (TM, D) native dtype -> MXU

    # anchor @ negative.T without an in-kernel transpose: contract the
    # feature (last) dim of both operands; accumulate in f32 on the MXU.
    s = lax.dot_general(
        a, neg,
        dimension_numbers=(((1,), (1,)), ((), ())),
        preferred_element_type=jnp.float32)            # (TN, TM)

    if mask_cols:
        tn_b, tm_b = s.shape
        col_ids = j * tm_b + lax.broadcasted_iota(jnp.int32, (tn_b, tm_b), 1)
        s = jnp.where(col_ids < m_valid, s, -jnp.inf)

    # Online logsumexp over the M reduction axis.
    m_prev = m_sc[...]                                              # (TN, 1)
    m_new = jnp.maximum(m_prev, jnp.max(s, axis=1, keepdims=True))  # (TN, 1)
    scale = jnp.exp(m_prev - m_new)                                 # (TN, 1)
    p = jnp.exp(s - m_new)                                          # (TN, TM)
    l_sc[...] = scale * l_sc[...] + jnp.sum(p, axis=1, keepdims=True)
    m_sc[...] = m_new

    # Epilogue on the last M step: per-row loss (padded rows handled in the
    # wrapper by slicing).
    @pl.when(j == nj - 1)
    def _():
        pos_sim = jnp.sum(anchor_ref[...].astype(jnp.float32) *
                          positive_ref[...].astype(jnp.float32),
                          axis=1, keepdims=True)                    # (TN, 1)
        r = rscore_ref[...].astype(jnp.float32)                     # (TN, 1)
        neg_sim = m_sc[...] + jnp.log(l_sc[...])                    # (TN, 1)
        loss_ref[...] = jnp.maximum(neg_sim - pos_sim + r + alpha, 0.0)


def softmax_loss_rscore(anchor, positive, negative, r_score, alpha=1.0,
                        tn=256, tm=512):
    """anchor, positive: (N, D); negative: (M, D); r_score: (N,) or (N, 1).

    Returns the scalar mean hinge/softmax loss (matches the PyTorch module).
    """
    n, d = anchor.shape
    m, _ = negative.shape
    r_score = jnp.asarray(r_score).reshape(n, 1)

    # Tile sizes: sublane-aligned (multiple of 8), clamped to the problem.
    tn = int(min(tn, _round_up(n, 8)))
    tm = int(min(tm, _round_up(m, 8)))
    n_pad = _round_up(n, tn)
    m_pad = _round_up(m, tm)

    if n_pad != n:
        anchor = jnp.pad(anchor, ((0, n_pad - n), (0, 0)))
        positive = jnp.pad(positive, ((0, n_pad - n), (0, 0)))
        r_score = jnp.pad(r_score, ((0, n_pad - n), (0, 0)))
    if m_pad != m:
        negative = jnp.pad(negative, ((0, m_pad - m), (0, 0)))

    grid = (n_pad // tn, m_pad // tm)

    kernel = functools.partial(
        _softmax_loss_rscore_kernel,
        alpha=float(alpha), m_valid=m, mask_cols=(m_pad != m))

    # VMEM budget: double-buffered input tiles + score tile + scratch, with
    # headroom; kept under v7x's 64 MiB physical VMEM.
    dt_bytes = anchor.dtype.itemsize
    est = (2 * (2 * tn * d + tm * d) * dt_bytes   # double-buffered inputs
           + tn * tm * 4                           # (TN, TM) f32 score tile
           + 4 * tn * 4)                           # scratch + output block
    vmem_limit = int(min(max(2 * est, 32 * 1024 * 1024), 48 * 1024 * 1024))

    cost = pl.CostEstimate(
        flops=2 * n_pad * m_pad * d,
        transcendentals=n_pad * m_pad,
        bytes_accessed=(2 * n_pad * d + m_pad * d) * dt_bytes + n_pad * 4)

    loss_rows = pl.pallas_call(
        kernel,
        out_shape=jax.ShapeDtypeStruct((n_pad, 1), jnp.float32),
        grid_spec=pltpu.PrefetchScalarGridSpec(
            num_scalar_prefetch=0,
            grid=grid,
            in_specs=[
                pl.BlockSpec((tn, d), lambda i, j: (i, 0)),   # anchor
                pl.BlockSpec((tn, d), lambda i, j: (i, 0)),   # positive
                pl.BlockSpec((tm, d), lambda i, j: (j, 0)),   # negative
                pl.BlockSpec((tn, 1), lambda i, j: (i, 0)),   # r_score
            ],
            out_specs=pl.BlockSpec((tn, 1), lambda i, j: (i, 0)),
            scratch_shapes=[pltpu.VMEM((tn, 1), jnp.float32),   # running max
                            pltpu.VMEM((tn, 1), jnp.float32)],  # running sum
        ),
        compiler_params=pltpu.CompilerParams(
            dimension_semantics=("parallel", "arbitrary"),
            vmem_limit_bytes=vmem_limit),
        cost_estimate=cost,
    )(anchor, positive, negative, r_score)

    # Final tiny reduction over valid rows (divisor = true N) in XLA.
    return jnp.sum(loss_rows[:n, 0]) / n


def _reference(anchor, positive, negative, r_score, alpha=1.0):
    pos_sim = jnp.sum(anchor * positive, axis=1, keepdims=True)
    neg_mul = anchor @ negative.T
    neg_sim = jax.scipy.special.logsumexp(neg_mul, axis=1, keepdims=True)
    loss = jax.nn.relu(neg_sim - pos_sim + r_score.reshape(-1, 1) + alpha)
    return loss.mean()


if __name__ == "__main__":
    key = jax.random.PRNGKey(0)

    # Test 1: small shapes matching the module spec (single tile).
    k1, k2, k3, k4 = jax.random.split(key, 4)
    N, D, M = 8, 32, 8
    anchor = jax.random.normal(k1, (N, D), dtype=jnp.float32)
    positive = jax.random.normal(k2, (N, D), dtype=jnp.float32)
    negative = jax.random.normal(k3, (M, D), dtype=jnp.float32)
    r_score = jax.random.normal(k4, (N, 1), dtype=jnp.float32)

    out = softmax_loss_rscore(anchor, positive, negative, r_score, alpha=1.0)
    out = jax.block_until_ready(out)
    ref = _reference(anchor, positive, negative, r_score, alpha=1.0)
    assert jnp.allclose(out, ref, atol=1e-5, rtol=1e-5), (out, ref)

    # Test 2: multi-tile grid with a ragged M (exercises the online
    # logsumexp accumulator, column masking, and the parallel N axis).
    k5, k6, k7, k8 = jax.random.split(jax.random.PRNGKey(1), 4)
    N2, D2, M2 = 16, 32, 40
    anchor2 = jax.random.normal(k5, (N2, D2), dtype=jnp.float32)
    positive2 = jax.random.normal(k6, (N2, D2), dtype=jnp.float32)
    negative2 = jax.random.normal(k7, (M2, D2), dtype=jnp.float32)
    r_score2 = jax.random.normal(k8, (N2, 1), dtype=jnp.float32)

    out2 = softmax_loss_rscore(anchor2, positive2, negative2, r_score2,
                               alpha=1.0, tn=8, tm=16)
    out2 = jax.block_until_ready(out2)
    ref2 = _reference(anchor2, positive2, negative2, r_score2, alpha=1.0)
    assert jnp.allclose(out2, ref2, atol=1e-5, rtol=1e-5), (out2, ref2)

    print("KERNEL_OK")
</pallas_src>

<mosaic_0001>
module attributes {stable_mosaic.version = 11 : i64} {
  func.func @_softmax_loss_rscore_kernel(%arg0: i32, %arg1: i32, %arg2: memref<8x32xf32, #tpu.memory_space<vmem>>, %arg3: memref<8x32xf32, #tpu.memory_space<vmem>>, %arg4: memref<8x32xf32, #tpu.memory_space<vmem>>, %arg5: memref<8x1xf32, #tpu.memory_space<vmem>>, %arg6: memref<8x1xf32, #tpu.memory_space<vmem>>, %arg7: memref<8x1xf32, #tpu.memory_space<vmem>>, %arg8: memref<8x1xf32, #tpu.memory_space<vmem>>) attributes {dimension_semantics = [#tpu.dimension_semantics<parallel>, #tpu.dimension_semantics<arbitrary>], iteration_bounds = array<i64: 1, 1>, scalar_prefetch = 0 : i64, scratch_operands = 2 : i64, tpu.core_type = #tpu.core_type<tc>, window_params = [{transform_indices = @transform_0, window_bounds = array<i64: 8, 32>}, {transform_indices = @transform_1, window_bounds = array<i64: 8, 32>}, {transform_indices = @transform_2, window_bounds = array<i64: 8, 32>}, {transform_indices = @transform_3, window_bounds = array<i64: 8, 1>}, {transform_indices = @transform_4, window_bounds = array<i64: 8, 1>}]} {
    %c0_i32 = arith.constant 0 : i32
    %0 = arith.cmpi eq, %arg1, %c0_i32 : i32
    %1 = arith.extui %0 : i1 to i32
    %c0_i32_0 = arith.constant 0 : i32
    %2 = arith.cmpi ne, %1, %c0_i32_0 : i32
    scf.if %2 {
      %cst_16 = arith.constant 0xFF800000 : f32
      %25 = vector.broadcast %cst_16 : f32 to vector<8x1xf32>
      %c0_17 = arith.constant 0 : index
      %c0_18 = arith.constant 0 : index
      %26 = vector.load %arg7[%c0_17, %c0_18] : memref<8x1xf32, #tpu.memory_space<vmem>>, vector<8x1xf32>
      tpu.vector_store %arg7[%c0_17, %c0_18], %25 {strides = array<i32>} : memref<8x1xf32, #tpu.memory_space<vmem>>, vector<8x1xf32>,
      %cst_19 = arith.constant 0.000000e+00 : f32
      %27 = vector.broadcast %cst_19 : f32 to vector<8x1xf32>
      %c0_20 = arith.constant 0 : index
      %c0_21 = arith.constant 0 : index
      %28 = vector.load %arg8[%c0_20, %c0_21] : memref<8x1xf32, #tpu.memory_space<vmem>>, vector<8x1xf32>
      tpu.vector_store %arg8[%c0_20, %c0_21], %27 {strides = array<i32>} : memref<8x1xf32, #tpu.memory_space<vmem>>, vector<8x1xf32>,
    } else {
    }
    %c0 = arith.constant 0 : index
    %c0_1 = arith.constant 0 : index
    %3 = vector.load %arg2[%c0, %c0_1] : memref<8x32xf32, #tpu.memory_space<vmem>>, vector<8x32xf32>
    %c0_2 = arith.constant 0 : index
    %c0_3 = arith.constant 0 : index
    %4 = vector.load %arg4[%c0_2, %c0_3] : memref<8x32xf32, #tpu.memory_space<vmem>>, vector<8x32xf32>
    %cst = arith.constant dense<0.000000e+00> : vector<8x8xf32>
    %5 = tpu.matmul %3, %4, %cst {dimension_numbers = #tpu.dot_dimension_numbers<[1], [1], [0], [0], [0, 0, 1, 0], [], []>} : vector<8x32xf32>, vector<8x32xf32>, vector<8x8xf32> -> vector<8x8xf32>
    %c0_4 = arith.constant 0 : index
    %c0_5 = arith.constant 0 : index
    %6 = vector.load %arg7[%c0_4, %c0_5] : memref<8x1xf32, #tpu.memory_space<vmem>>, vector<8x1xf32>
    %cst_6 = arith.constant dense<0xFF800000> : vector<8xf32>
    %7 = vector.multi_reduction <maximumf>, %5, %cst_6 [1] : vector<8x8xf32> to vector<8xf32>
    %8 = vector.shape_cast %7 : vector<8xf32> to vector<8x1xf32>
    %9 = arith.maximumf %6, %8 : vector<8x1xf32>
    %10 = arith.subf %6, %9 : vector<8x1xf32>
    %11 = math.exp %10 : vector<8x1xf32>
    %12 = vector.broadcast %9 : vector<8x1xf32> to vector<8x8xf32>
    %13 = arith.subf %5, %12 : vector<8x8xf32>
    %14 = math.exp %13 : vector<8x8xf32>
    %c0_7 = arith.constant 0 : index
    %c0_8 = arith.constant 0 : index
    %15 = vector.load %arg8[%c0_7, %c0_8] : memref<8x1xf32, #tpu.memory_space<vmem>>, vector<8x1xf32>
    %16 = arith.mulf %11, %15 : vector<8x1xf32>
    %cst_9 = arith.constant dense<0.000000e+00> : vector<8xf32>
    %17 = vector.multi_reduction <add>, %14, %cst_9 [1] : vector<8x8xf32> to vector<8xf32>
    %18 = vector.shape_cast %17 : vector<8xf32> to vector<8x1xf32>
    %19 = arith.addf %16, %18 : vector<8x1xf32>
    %c0_10 = arith.constant 0 : index
    %c0_11 = arith.constant 0 : index
    %20 = vector.load %arg8[%c0_10, %c0_11] : memref<8x1xf32, #tpu.memory_space<vmem>>, vector<8x1xf32>
    tpu.vector_store %arg8[%c0_10, %c0_11], %19 {strides = array<i32>} : memref<8x1xf32, #tpu.memory_space<vmem>>, vector<8x1xf32>,
    %c0_12 = arith.constant 0 : index
    %c0_13 = arith.constant 0 : index
    %21 = vector.load %arg7[%c0_12, %c0_13] : memref<8x1xf32, #tpu.memory_space<vmem>>, vector<8x1xf32>
    tpu.vector_store %arg7[%c0_12, %c0_13], %9 {strides = array<i32>} : memref<8x1xf32, #tpu.memory_space<vmem>>, vector<8x1xf32>,
    %c0_i32_14 = arith.constant 0 : i32
    %22 = arith.cmpi eq, %arg1, %c0_i32_14 : i32
    %23 = arith.extui %22 : i1 to i32
    %c0_i32_15 = arith.constant 0 : i32
    %24 = arith.cmpi ne, %23, %c0_i32_15 : i32
    scf.if %24 {
      %c0_16 = arith.constant 0 : index
      %c0_17 = arith.constant 0 : index
      %25 = vector.load %arg2[%c0_16, %c0_17] : memref<8x32xf32, #tpu.memory_space<vmem>>, vector<8x32xf32>
      %c0_18 = arith.constant 0 : index
      %c0_19 = arith.constant 0 : index
      %26 = vector.load %arg3[%c0_18, %c0_19] : memref<8x32xf32, #tpu.memory_space<vmem>>, vector<8x32xf32>
      %27 = arith.mulf %25, %26 : vector<8x32xf32>
      %cst_20 = arith.constant dense<0.000000e+00> : vector<8xf32>
      %28 = vector.multi_reduction <add>, %27, %cst_20 [1] : vector<8x32xf32> to vector<8xf32>
      %29 = vector.shape_cast %28 : vector<8xf32> to vector<8x1xf32>
      %c0_21 = arith.constant 0 : index
      %c0_22 = arith.constant 0 : index
      %30 = vector.load %arg5[%c0_21, %c0_22] : memref<8x1xf32, #tpu.memory_space<vmem>>, vector<8x1xf32>
      %c0_23 = arith.constant 0 : index
      %c0_24 = arith.constant 0 : index
      %31 = vector.load %arg7[%c0_23, %c0_24] : memref<8x1xf32, #tpu.memory_space<vmem>>, vector<8x1xf32>
      %c0_25 = arith.constant 0 : index
      %c0_26 = arith.constant 0 : index
      %32 = vector.load %arg8[%c0_25, %c0_26] : memref<8x1xf32, #tpu.memory_space<vmem>>, vector<8x1xf32>
      %33 = math.log %32 : vector<8x1xf32>
      %34 = arith.addf %31, %33 : vector<8x1xf32>
      %35 = arith.subf %34, %29 : vector<8x1xf32>
      %36 = arith.addf %35, %30 : vector<8x1xf32>
      %cst_27 = arith.constant 1.000000e+00 : f32
      %37 = vector.broadcast %cst_27 : f32 to vector<8x1xf32>
      %38 = arith.addf %36, %37 : vector<8x1xf32>
      %cst_28 = arith.constant 0.000000e+00 : f32
      %39 = vector.broadcast %cst_28 : f32 to vector<8x1xf32>
      %40 = arith.maximumf %38, %39 : vector<8x1xf32>
      %c0_29 = arith.constant 0 : index
      %c0_30 = arith.constant 0 : index
      %41 = vector.load %arg6[%c0_29, %c0_30] : memref<8x1xf32, #tpu.memory_space<vmem>>, vector<8x1xf32>
      tpu.vector_store %arg6[%c0_29, %c0_30], %40 {strides = array<i32>} : memref<8x1xf32, #tpu.memory_space<vmem>>, vector<8x1xf32>,
    } else {
    }
    return
  }
  func.func @transform_0(%arg0: i32, %arg1: i32) -> (i32, i32) {
    %c0_i32 = arith.constant 0 : i32
    %c0_i32_0 = arith.constant 0 : i32
    return %arg0, %c0_i32 : i32, i32
  }
  func.func @transform_1(%arg0: i32, %arg1: i32) -> (i32, i32) {
    %c0_i32 = arith.constant 0 : i32
    %c0_i32_0 = arith.constant 0 : i32
    return %arg0, %c0_i32 : i32, i32
  }
  func.func @transform_2(%arg0: i32, %arg1: i32) -> (i32, i32) {
    %c0_i32 = arith.constant 0 : i32
    %c0_i32_0 = arith.constant 0 : i32
    return %arg1, %c0_i32 : i32, i32
  }
  func.func @transform_3(%arg0: i32, %arg1: i32) -> (i32, i32) {
    %c0_i32 = arith.constant 0 : i32
    %c0_i32_0 = arith.constant 0 : i32
    return %arg0, %c0_i32 : i32, i32
  }
  func.func @transform_4(%arg0: i32, %arg1: i32) -> (i32, i32) {
    %c0_i32 = arith.constant 0 : i32
    %c0_i32_0 = arith.constant 0 : i32
    return %arg0, %c0_i32 : i32, i32
  }
}

</mosaic_0001>

<llo_original>
// kernel: tpu_custom_call.1
$region0: #{tpu_custom_call.1}
  #allocation0 [shape = 'u32[]', space=smem, size = 0x4, offset = 0x4, fixed_abs, tag = 'smem constant byte address 0x4 - core index']
  #allocation1 [shape = 'u32[144,128]{1,0:T(1,128)}', space=vmem, size = 0x12000, scoped, tag = 'internal scratch']
  #allocation2 [shape = 'f32[8,1]{1,0:T(8,128)}', space=vmem, size = 0x1000, scoped, tag = 'scratch operand']
  #allocation3 [shape = 'f32[8,1]{1,0:T(8,128)}', space=vmem, size = 0x1000, scoped, tag = 'scratch operand']
  %s0 = inlined_call_operand.vmem [shape: f32[8,32], index: 0, kind: input, shape index: {}]
  %s1 = inlined_call_operand.hbm [shape: f32[8,32], index: 1, kind: input, shape index: {}]
  %s2 = inlined_call_operand.vmem [shape: f32[8,32], index: 2, kind: input, shape index: {}]
  %s3 = inlined_call_operand.vmem [shape: f32[8,1], index: 3, kind: input, shape index: {}]
  %s4 = inlined_call_operand.vmem [shape: f32[8,1], index: 4, kind: output, shape index: {}]
  %s5 = sld [smem:[#allocation0]]
  $region38: #{tpu_custom_call.1} parent=0
    _
  %s7 = ssub.s32 1, %s5
  %s8 = scalar_select 0, %s7, %s5
  $region1: #{tpu_custom_call.1} parent=0
    #allocation4 [shape = 'u8[4096]{0}', space=vmem, size = 0x1000, scoped, tag = 'input window, operand 1, single buffered']
    #allocation5 [shape = 's32[1]{0}', space=sflag, size = 0x4, scoped, tag = 'scoped memory for tpu_custom_call.1']
    %9 = vsyncpa [#allocation5], 0
    // Predicated region
    $region2: #{tpu_custom_call.1} parent=1 // pred_check
      _
    $region3: #{tpu_custom_call.1} parent=1 // pred_check_branch
      %11 = sbr.rel (0) target = $region5
    $region4: #{tpu_custom_call.1} parent=1 // pred_region
      _
    $region5: #{tpu_custom_call.1} parent=1 // pred_fallthru
      _
    // Predicated region
    $region6: #{tpu_custom_call.1} parent=1 // pred_check
      _
    $region7: #{tpu_custom_call.1} parent=1 // pred_check_branch
      %13 = sbr.rel (0) target = $region9
    $region8: #{tpu_custom_call.1} parent=1 // pred_region
      %s15 = ssub.s32 128, 128
      %16 = vsyncadd [#allocation5], %s15
      %s18 = sshll.u32 [#allocation4], 4
      %s19 = int_to_ptr.vmem [resolvable:$true] %s18
      %21 = dma.hbm_to_vmem [thread:$0]  %s1, 128, %s19, [#allocation5]
    $region9: #{tpu_custom_call.1} parent=1 // pred_fallthru
      _
    // Predicated region
    $region10: #{tpu_custom_call.1} parent=1 // pred_check
      _
    $region11: #{tpu_custom_call.1} parent=1 // pred_check_branch
      %23 = sbr.rel (0) target = $region13
    $region12: #{tpu_custom_call.1} parent=1 // pred_region
      _
    $region13: #{tpu_custom_call.1} parent=1 // pred_fallthru
      _
    // Predicated region
    $region14: #{tpu_custom_call.1} parent=1 // pred_check
      _
    $region15: #{tpu_custom_call.1} parent=1 // pred_check_branch
      %25 = sbr.rel (0) target = $region17
    $region16: #{tpu_custom_call.1} parent=1 // pred_region
      _
    $region17: #{tpu_custom_call.1} parent=1 // pred_fallthru
      _
    // Predicated region
    $region18: #{tpu_custom_call.1} parent=1 // pred_check
      _
    $region19: #{tpu_custom_call.1} parent=1 // pred_check_branch
      %27 = sbr.rel (0) target = $region21
    $region20: #{tpu_custom_call.1} parent=1 // pred_region
      %28 = dma.done [#allocation5], 128
    $region21: #{tpu_custom_call.1} parent=1 // pred_fallthru
      _
    %p29 = scmp.eq.s32.totalorder 0, 0
    // Predicated region
    $region22: #{tpu_custom_call.1} parent=1 // pred_check
      %p30 = pneg %p29
    $region23: #{tpu_custom_call.1} parent=1 // pred_check_branch
      %32 = sbr.rel (%p30) target = $region25
    $region24: #{tpu_custom_call.1} parent=1 // pred_region
      %vm33 = vcmask 7168
      %34 = vst.msk [vmem:[#allocation2] sm:$0xff] %vm33, -inf
      %35 = vst.msk [vmem:[#allocation3] sm:$0xff] %vm33, 0.0
    $region25: #{tpu_custom_call.1} parent=1 // pred_fallthru
      _
    %v36 = vld [vmem:[%s0] sm:$0xff]
    %v37 = vld [vmem:[%s2] sm:$0xff]
    %vm38 = vcmask 261120
    %v40 = vsel %vm38, %v36, 0
    %v43 = vsel %vm38, %v37, 0
    %45 = vmatprep.subr.mxu0 0.0
    %46 = vmatpush1.xpose.msra.mxu0 %v43
    %47 = vmatprep.subr.mxu0 0.0
    %48 = vmatpush1.xpose.msra.mxu0 0.0
    %49 = vmatprep.subr.mxu0 0.0
    %50 = vmatpush1.xpose.msra.mxu0 0.0
    %51 = vmatprep.subr.mxu0 0.0
    %52 = vmatpush1.xpose.msra.mxu0 0.0
    %53 = vmatprep.subr.mxu0 0.0
    %54 = vmatpush1.xpose.msra.mxu0 0.0
    %55 = vmatprep.subr.mxu0 0.0
    %56 = vmatpush1.xpose.msra.mxu0 0.0
    %57 = vmatprep.subr.mxu0 0.0
    %58 = vmatpush1.xpose.msra.mxu0 0.0
    %59 = vmatprep.subr.mxu0 0.0
    %60 = vmatpush1.xpose.msra.mxu0 0.0
    %61 = vmatprep.subr.mxu0 0.0
    %62 = vmatpush1.xpose.msra.mxu0 0.0
    %63 = vmatprep.subr.mxu0 0.0
    %64 = vmatpush1.xpose.msra.mxu0 0.0
    %65 = vmatprep.subr.mxu0 0.0
    %66 = vmatpush1.xpose.msra.mxu0 0.0
    %67 = vmatprep.subr.mxu0 0.0
    %68 = vmatpush1.xpose.msra.mxu0 0.0
    %69 = vmatprep.subr.mxu0 0.0
    %70 = vmatpush1.xpose.msra.mxu0 0.0
    %71 = vmatprep.subr.mxu0 0.0
    %72 = vmatpush1.xpose.msra.mxu0 0.0
    %73 = vmatprep.subr.mxu0 0.0
    %74 = vmatpush1.xpose.msra.mxu0 0.0
    %75 = vmatprep.subr.mxu0 0.0
    %76 = vmatpush1.xpose.msra.mxu0 0.0
    %77 = vmatprep.subr.mxu0 0.0
    %78 = vmatpush1.xpose.msra.mxu0 0.0
    %79 = vmatprep.subr.mxu0 0.0
    %80 = vmatpush1.xpose.msra.mxu0 0.0
    %81 = vmatprep.subr.mxu0 0.0
    %82 = vmatpush1.xpose.msra.mxu0 0.0
    %83 = vmatprep.subr.mxu0 0.0
    %84 = vmatpush1.xpose.msra.mxu0 0.0
    %85 = vmatprep.subr.mxu0 0.0
    %86 = vmatpush1.xpose.msra.mxu0 0.0
    %87 = vmatprep.subr.mxu0 0.0
    %88 = vmatpush1.xpose.msra.mxu0 0.0
    %89 = vmatprep.subr.mxu0 0.0
    %90 = vmatpush1.xpose.msra.mxu0 0.0
    %91 = vmatprep.subr.mxu0 0.0
    %92 = vmatpush1.xpose.msra.mxu0 0.0
    %93 = vmatprep.subr.mxu0 0.0
    %94 = vmatpush1.xpose.msra.mxu0 0.0
    %95 = vmatprep.subr.mxu0 0.0
    %96 = vmatpush1.xpose.msra.mxu0 0.0
    %97 = vmatprep.subr.mxu0 0.0
    %98 = vmatpush1.xpose.msra.mxu0 0.0
    %99 = vmatprep.subr.mxu0 0.0
    %100 = vmatpush1.xpose.msra.mxu0 0.0
    %101 = vmatprep.subr.mxu0 0.0
    %102 = vmatpush1.xpose.msra.mxu0 0.0
    %103 = vmatprep.subr.mxu0 0.0
    %104 = vmatpush1.xpose.msra.mxu0 0.0
    %105 = vmatprep.subr.mxu0 0.0
    %106 = vmatpush1.xpose.msra.mxu0 0.0
    %107 = vmatprep.subr.mxu0 0.0
    %108 = vmatpush1.xpose.msra.mxu0 0.0
    %109 = vmatprep.mubr.f32.mxu0 0.0
    %110 = vmatmul.mubr.f32.gmra.mrb[0].mxu0 %v40
    %v111 = vpop.f32.mrb[0].mxu0
    %v112 = vadd.f32 0.0, %v111
    %v113 = vpop.f32.mrb[0].mxu0
    %114 = vdwg.mxu0
    %v115 = vld [vmem:[#allocation2] sm:$0xff]
    %vm116 = vcmask 64512
    %v117 = vsel %vm116, %v112, -inf
    %118 = vmax.xlane.f32.xlu0 %v117
    %v119 = vpop.xlane.xlu0 %118
    %v120 = vmax.f32 %v115, %v119
    %v121 = vsub.f32 %v115, %v120
    %v122 = vmul.f32 %v121, 1.442695
    %v123 = vpow.pop %v122
    %125 = vset.pattern.permute.xlu0 0
    %126 = vperm.xlu0 %125, %v120
    %v127 = vpop.permute.xlu0 %126
    %v129 = vsub.f32 %v112, %v127
    %v130 = vmul.f32 %v129, 1.442695
    %v131 = vpow.pop %v130
    %v132 = vld [vmem:[#allocation3] sm:$0xff]
    %v133 = vmul.f32 %v123, %v132
    %v134 = vsel %vm116, %v131, 0.0
    %135 = vadd.xlane.f32.xlu0 %v134
    %v136 = vpop.xlane.xlu0 %135
    %v137 = vadd.f32 %v133, %v136
    %vm138 = vcmask 7168
    %139 = vst.msk [vmem:[#allocation3] sm:$0xff] %vm138, %v137
    %140 = vst.msk [vmem:[#allocation2] sm:$0xff] %vm138, %v120
    // Predicated region
    $region26: #{tpu_custom_call.1} parent=1 // pred_check
      %p141 = pneg %p29
    $region27: #{tpu_custom_call.1} parent=1 // pred_check_branch
      %143 = sbr.rel (%p141) target = $region29
    $region28: #{tpu_custom_call.1} parent=1 // pred_region
      %v144 = vld [vmem:[%s0] sm:$0xff]
      %v145 = vld [vmem:[#allocation4] sm:$0xff]
      %v146 = vmul.f32 %v144, %v145
      %v147 = vsel %vm38, %v146, 0.0
      %148 = vadd.xlane.f32.xlu0 %v147
      %v149 = vpop.xlane.xlu0 %148
      %v150 = vld [vmem:[%s3] sm:$0xff]
      %v151 = vld [vmem:[#allocation2] sm:$0xff]
      %v152 = vld [vmem:[#allocation3] sm:$0xff]
      %v153 = vlog2.pop %v152
      %v154 = vmul.f32 %v153, 0.6931472
      %v155 = vadd.f32 %v151, %v154
      %v156 = vsub.f32 %v155, %v149
      %v157 = vadd.f32 %v156, %v150
      %v158 = vadd.f32 %v157, 1.0
      %v159 = vmax.f32 %v158, 0.0
      %160 = vst.msk [vmem:[%s4] sm:$0xff] %vm138, %v159
    $region29: #{tpu_custom_call.1} parent=1 // pred_fallthru
      _
    // Predicated region
    $region30: #{tpu_custom_call.1} parent=1 // pred_check
      _
    $region31: #{tpu_custom_call.1} parent=1 // pred_check_branch
      %162 = sbr.rel (0) target = $region33
    $region32: #{tpu_custom_call.1} parent=1 // pred_region
      _
    $region33: #{tpu_custom_call.1} parent=1 // pred_fallthru
      _
    // Predicated region
    $region34: #{tpu_custom_call.1} parent=1 // pred_check
      _
    $region35: #{tpu_custom_call.1} parent=1 // pred_check_branch
      %164 = sbr.rel (0) target = $region37
    $region36: #{tpu_custom_call.1} parent=1 // pred_region
      _
    $region37: #{tpu_custom_call.1} parent=1 // pred_fallthru
      _
    %165 = vsyncpa [#allocation5], 1

</llo_original>
